<compile_context>
chip_gen: v7x
topology: tpu7x:2x2x1
jax: 0.10.0
libtpu: 0.0.40
codegen_flags: <defaults>
</compile_context>

<pallas_src>
import jax
import jax.numpy as jnp
from jax.experimental import pallas as pl
from jax.experimental.pallas import tpu as pltpu

IN_FEATS = 3 * 3 * 2  # 18
HID = 10
OUT = 1


def _round_up(x, m):
    return ((x + m - 1) // m) * m


def _mlp_kernel(x_ref, w1t_ref, b1_ref, w2_ref, b2_ref, o_ref):
    # x_ref:   (TILE_B, 18)  f32   one batch tile (ragged last tile is masked)
    # w1t_ref: (10, 18)      f32   layer-1 weight, feature-major (resident)
    # b1_ref:  (10, 1)       f32
    # w2_ref:  (10, 1)       f32
    # b2_ref:  (1, 1)        f32
    # o_ref:   (1, TILE_B)   f32   lane-dense output row for this tile
    x = x_ref[...]
    w1t = w1t_ref[...]

    # Layer 1 on the MXU with the batch on the lane axis (contract both
    # operands over the 18 features, f32 accumulate):
    #   h[h, b] = sum_k w1t[h, k] * x[b, k]   -> (10, TILE_B)
    h = jax.lax.dot_general(
        w1t, x,
        dimension_numbers=(((1,), (1,)), ((), ())),
        preferred_element_type=jnp.float32,
    )
    h = jnp.maximum(h + b1_ref[...], 0.0)  # bias + ReLU on the VPU (f32)

    # Layer 2 (10 -> 1): broadcast multiply + sublane (XLU) reduce, not a
    # 1-wide MXU matmul.
    y = jnp.sum(h * w2_ref[...], axis=0, keepdims=True) + b2_ref[...]  # (1, TILE_B)

    o_ref[...] = jax.nn.sigmoid(y).astype(o_ref.dtype)


def ttt_netO_forward(x, w1, b1, w2, b2, *, tile_b=24 * 1024):
    """Forward pass of ttt_netO.

    x: any shape whose element count is a multiple of 18 (e.g. (B, 3, 3, 2));
       flattened row-major to (-1, 18), matching torch's x.view(-1, 18).
    Weights stored transposed vs PyTorch: w1 is (18, 10), w2 is (10, 1).
    Returns: (N, 1) float32, N = x.size // 18.
    """
    x2d = x.reshape(-1, IN_FEATS)   # metadata-only reshape, no HBM pass
    n = x2d.shape[0]

    # --- Tile-size policy --------------------------------------------------
    # Big enough to amortize the ~0.35 us per-grid-step overhead, small enough
    # that the lane-padded f32 VMEM image (512 B/row, double-buffered) stays
    # well inside v7x's 64 MiB VMEM. Only shrinks for small batches.
    tile_b = max(128, _round_up(int(tile_b), 128))
    if n >= 4 * 128:
        # Keep >= ~4 tiles for large batches: shards the "parallel" axis
        # across v7x's two TensorCores and gives double-buffering real overlap.
        tile_b = min(tile_b, max(128, _round_up(pl.cdiv(n, 4), 128)))
    if tile_b >= n:
        # Single full-extent block (equal-to-array dims => exempt from the
        # (8,128) block rule); avoids blocks larger than the array.
        tile_b = n
    num_tiles = pl.cdiv(n, tile_b)

    w1t = jnp.asarray(w1, jnp.float32).T                   # (10, 18), tiny
    b1c = jnp.asarray(b1, jnp.float32).reshape(HID, 1)     # (10, 1)
    w2c = jnp.asarray(w2, jnp.float32).reshape(HID, OUT)   # (10, 1)
    b2c = jnp.asarray(b2, jnp.float32).reshape(1, 1)       # (1, 1)

    out_row = pl.pallas_call(
        _mlp_kernel,
        out_shape=jax.ShapeDtypeStruct((1, n), jnp.float32),
        grid=(num_tiles,),
        in_specs=[
            # Batch-tiled x, read straight from HBM as f32 (no wrapper cast or
            # pad); the ragged last tile is a Pallas partial block whose OOB
            # rows only feed masked-off output lanes.
            # TODO(synk): if an upstream producer can emit x as (18, N) with
            # the batch on lanes, switch to BlockSpec((18, tile_b), ...) to
            # avoid the 18->128 lane padding of the VMEM image (and on v5e
            # consider pipeline_mode=pl.Buffered(3) to hide the strided DMA).
            pl.BlockSpec((tile_b, IN_FEATS), lambda i: (i, 0)),
            pl.BlockSpec((HID, IN_FEATS), lambda i: (0, 0)),   # resident W1^T
            pl.BlockSpec((HID, 1), lambda i: (0, 0)),          # resident b1
            pl.BlockSpec((HID, OUT), lambda i: (0, 0)),        # resident w2
            pl.BlockSpec((1, 1), lambda i: (0, 0)),            # resident b2
        ],
        out_specs=pl.BlockSpec((1, tile_b), lambda i: (0, i)),  # lane-dense row
        compiler_params=pltpu.CompilerParams(
            dimension_semantics=("parallel",),    # megacore split on v7x
            vmem_limit_bytes=48 * 1024 * 1024,    # explicit (v5e default 16 MiB)
        ),
    )(jnp.asarray(x2d, jnp.float32), w1t, b1c, w2c, b2c)

    # (1, N) -> (N, 1): metadata-only reshape, no slice needed (out_shape
    # already matches N exactly; the partial last block is masked on store).
    return out_row.reshape(n, OUT)


def init_params(key):
    """Deterministic parameter init (PyTorch-style uniform fan-in bounds)."""
    k1, k2, k3, k4 = jax.random.split(key, 4)
    bound1 = 1.0 / jnp.sqrt(IN_FEATS)
    bound2 = 1.0 / jnp.sqrt(HID)
    # Stored as (in, out) — transposed relative to torch's (out, in).
    w1 = jax.random.uniform(k1, (IN_FEATS, HID), jnp.float32, -bound1, bound1)
    b1 = jax.random.uniform(k2, (HID,), jnp.float32, -bound1, bound1)
    w2 = jax.random.uniform(k3, (HID, OUT), jnp.float32, -bound2, bound2)
    b2 = jax.random.uniform(k4, (OUT,), jnp.float32, -bound2, bound2)
    return w1, b1, w2, b2


if __name__ == "__main__":
    key = jax.random.PRNGKey(0)
    kx, kp = jax.random.split(key)

    # Small input consistent with the module: 300 boards of shape (3, 3, 2).
    batch = 300
    x = jax.random.normal(kx, (batch, 3, 3, 2), jnp.float32)
    w1, b1, w2, b2 = init_params(kp)

    # Pure f32 reference (matches the torch module's math exactly).
    x2d = x.reshape(-1, IN_FEATS)
    ref = jax.nn.sigmoid(jnp.maximum(x2d @ w1 + b1, 0.0) @ w2 + b2)

    # 1) Production tile policy (here collapses to one full-extent 300-row block).
    out = jax.block_until_ready(ttt_netO_forward(x, w1, b1, w2, b2))
    assert out.shape == (batch, 1), out.shape
    assert jnp.allclose(out, ref, atol=2e-5, rtol=2e-5), (
        float(jnp.max(jnp.abs(out - ref))))

    # 2) Coverage test (not a perf config): forced 128-row tiles -> 3-step grid
    #    with a ragged, masked last block, exercising the pipelined path.
    out_t = jax.block_until_ready(ttt_netO_forward(x, w1, b1, w2, b2, tile_b=128))
    assert out_t.shape == (batch, 1), out_t.shape
    assert jnp.allclose(out_t, ref, atol=2e-5, rtol=2e-5), (
        float(jnp.max(jnp.abs(out_t - ref))))

    print("KERNEL_OK")
</pallas_src>

<mosaic_0001>
module attributes {stable_mosaic.version = 11 : i64} {
  func.func @_mlp_kernel(%arg0: i32, %arg1: memref<300x18xf32, #tpu.memory_space<vmem>>, %arg2: memref<10x18xf32, #tpu.memory_space<vmem>>, %arg3: memref<10x1xf32, #tpu.memory_space<vmem>>, %arg4: memref<10x1xf32, #tpu.memory_space<vmem>>, %arg5: memref<1x1xf32, #tpu.memory_space<vmem>>, %arg6: memref<1x300xf32, #tpu.memory_space<vmem>>) attributes {dimension_semantics = [#tpu.dimension_semantics<parallel>], iteration_bounds = array<i64: 1>, scalar_prefetch = 0 : i64, scratch_operands = 0 : i64, tpu.core_type = #tpu.core_type<tc>, window_params = [{transform_indices = @transform_0, window_bounds = array<i64: 300, 18>}, {pipeline_mode = #tpu.pipeline_mode<synchronous>, transform_indices = @transform_1, window_bounds = array<i64: 10, 18>}, {pipeline_mode = #tpu.pipeline_mode<synchronous>, transform_indices = @transform_2, window_bounds = array<i64: 10, 1>}, {pipeline_mode = #tpu.pipeline_mode<synchronous>, transform_indices = @transform_3, window_bounds = array<i64: 10, 1>}, {pipeline_mode = #tpu.pipeline_mode<synchronous>, transform_indices = @transform_4, window_bounds = array<i64: 1, 1>}, {transform_indices = @transform_5, window_bounds = array<i64: 1, 300>}]} {
    %c0 = arith.constant 0 : index
    %c0_0 = arith.constant 0 : index
    %0 = vector.load %arg1[%c0, %c0_0] : memref<300x18xf32, #tpu.memory_space<vmem>>, vector<300x18xf32>
    %c0_1 = arith.constant 0 : index
    %c0_2 = arith.constant 0 : index
    %1 = vector.load %arg2[%c0_1, %c0_2] : memref<10x18xf32, #tpu.memory_space<vmem>>, vector<10x18xf32>
    %cst = arith.constant dense<0.000000e+00> : vector<10x300xf32>
    %2 = tpu.matmul %1, %0, %cst {dimension_numbers = #tpu.dot_dimension_numbers<[1], [1], [0], [0], [0, 0, 1, 0], [], []>} : vector<10x18xf32>, vector<300x18xf32>, vector<10x300xf32> -> vector<10x300xf32>
    %c0_3 = arith.constant 0 : index
    %c0_4 = arith.constant 0 : index
    %3 = vector.load %arg3[%c0_3, %c0_4] : memref<10x1xf32, #tpu.memory_space<vmem>>, vector<10x1xf32>
    %4 = vector.broadcast %3 : vector<10x1xf32> to vector<10x300xf32>
    %5 = arith.addf %2, %4 : vector<10x300xf32>
    %cst_5 = arith.constant 0.000000e+00 : f32
    %6 = vector.broadcast %cst_5 : f32 to vector<10x300xf32>
    %7 = arith.maximumf %5, %6 : vector<10x300xf32>
    %c0_6 = arith.constant 0 : index
    %c0_7 = arith.constant 0 : index
    %8 = vector.load %arg4[%c0_6, %c0_7] : memref<10x1xf32, #tpu.memory_space<vmem>>, vector<10x1xf32>
    %9 = vector.broadcast %8 : vector<10x1xf32> to vector<10x300xf32>
    %10 = arith.mulf %7, %9 : vector<10x300xf32>
    %cst_8 = arith.constant dense<0.000000e+00> : vector<300xf32>
    %11 = vector.multi_reduction <add>, %10, %cst_8 [0] : vector<10x300xf32> to vector<300xf32>
    %12 = vector.shape_cast %11 : vector<300xf32> to vector<1x300xf32>
    %c0_9 = arith.constant 0 : index
    %c0_10 = arith.constant 0 : index
    %13 = vector.load %arg5[%c0_9, %c0_10] : memref<1x1xf32, #tpu.memory_space<vmem>>, vector<1x1xf32>
    %14 = vector.broadcast %13 : vector<1x1xf32> to vector<1x300xf32>
    %15 = arith.addf %12, %14 : vector<1x300xf32>
    %16 = arith.negf %15 : vector<1x300xf32>
    %17 = math.exp %16 : vector<1x300xf32>
    %cst_11 = arith.constant 1.000000e+00 : f32
    %18 = vector.broadcast %cst_11 : f32 to vector<1x300xf32>
    %19 = arith.addf %18, %17 : vector<1x300xf32>
    %20 = arith.divf %18, %19 : vector<1x300xf32>
    %c0_12 = arith.constant 0 : index
    %c0_13 = arith.constant 0 : index
    %21 = vector.load %arg6[%c0_12, %c0_13] : memref<1x300xf32, #tpu.memory_space<vmem>>, vector<1x300xf32>
    tpu.vector_store %arg6[%c0_12, %c0_13], %20 {strides = array<i32>} : memref<1x300xf32, #tpu.memory_space<vmem>>, vector<1x300xf32>,
    return
  }
  func.func @transform_0(%arg0: i32) -> (i32, i32) {
    %c0_i32 = arith.constant 0 : i32
    %c0_i32_0 = arith.constant 0 : i32
    return %arg0, %c0_i32 : i32, i32
  }
  func.func @transform_1(%arg0: i32) -> (i32, i32) {
    %c0_i32 = arith.constant 0 : i32
    %c0_i32_0 = arith.constant 0 : i32
    %c0_i32_1 = arith.constant 0 : i32
    return %c0_i32, %c0_i32_0 : i32, i32
  }
  func.func @transform_2(%arg0: i32) -> (i32, i32) {
    %c0_i32 = arith.constant 0 : i32
    %c0_i32_0 = arith.constant 0 : i32
    %c0_i32_1 = arith.constant 0 : i32
    return %c0_i32, %c0_i32_0 : i32, i32
  }
  func.func @transform_3(%arg0: i32) -> (i32, i32) {
    %c0_i32 = arith.constant 0 : i32
    %c0_i32_0 = arith.constant 0 : i32
    %c0_i32_1 = arith.constant 0 : i32
    return %c0_i32, %c0_i32_0 : i32, i32
  }
  func.func @transform_4(%arg0: i32) -> (i32, i32) {
    %c0_i32 = arith.constant 0 : i32
    %c0_i32_0 = arith.constant 0 : i32
    %c0_i32_1 = arith.constant 0 : i32
    return %c0_i32, %c0_i32_0 : i32, i32
  }
  func.func @transform_5(%arg0: i32) -> (i32, i32) {
    %c0_i32 = arith.constant 0 : i32
    %c0_i32_0 = arith.constant 0 : i32
    return %c0_i32, %arg0 : i32, i32
  }
}

</mosaic_0001>

<llo_original>
// kernel: tpu_custom_call.1
$region0: #{tpu_custom_call.1}
  #allocation0 [shape = 'u32[]', space=smem, size = 0x4, offset = 0x4, fixed_abs, tag = 'smem constant byte address 0x4 - core index']
  #allocation1 [shape = 'u32[144,128]{1,0:T(1,128)}', space=vmem, size = 0x12000, scoped, tag = 'internal scratch']
  #allocation2 [shape = 'f32[1,1]{1,0:T(1,128)S(1)}', space=vmem, size = 0x200, scoped, tag = 'scoped memory for tpu_custom_call.1']
  %s0 = inlined_call_operand.vmem [shape: f32[300,18], index: 0, kind: input, shape index: {}]
  %s1 = inlined_call_operand.vmem [shape: f32[10,18], index: 1, kind: input, shape index: {}]
  %s2 = inlined_call_operand.vmem [shape: f32[10,1], index: 2, kind: input, shape index: {}]
  %s3 = inlined_call_operand.vmem [shape: f32[10,1], index: 3, kind: input, shape index: {}]
  %s4 = inlined_call_operand.<no memory space> [shape: f32[1,1], index: 4, kind: input, shape index: {}]
  %s5 = inlined_call_operand.hbm [shape: f32[1,300], index: 5, kind: output, shape index: {}]
  %s6 = sld [smem:[#allocation0]]
  $region30: #{tpu_custom_call.1} parent=0
    _
  %s8 = ssub.s32 1, %s6
  %s9 = scalar_select 0, %s8, %s6
  %v10 = vstv %s4
  %11 = vst [vmem:[#allocation2] sm:$0x1] %v10
  $region1: #{tpu_custom_call.1} parent=0
    #allocation3 [shape = 'u8[1536]{0}', space=vmem, size = 0x800, scoped, tag = 'output window, operand 0, single buffered']
    #allocation4 [shape = 's32[1]{0}', space=sflag, size = 0x4, scoped, tag = 'scoped memory for tpu_custom_call.1']
    %12 = vsyncpa [#allocation4], 0
    // Predicated region
    $region2: #{tpu_custom_call.1} parent=1 // pred_check
      _
    $region3: #{tpu_custom_call.1} parent=1 // pred_check_branch
      %14 = sbr.rel (0) target = $region5
    $region4: #{tpu_custom_call.1} parent=1 // pred_region
      _
    $region5: #{tpu_custom_call.1} parent=1 // pred_fallthru
      _
    // Predicated region
    $region6: #{tpu_custom_call.1} parent=1 // pred_check
      _
    $region7: #{tpu_custom_call.1} parent=1 // pred_check_branch
      %16 = sbr.rel (0) target = $region9
    $region8: #{tpu_custom_call.1} parent=1 // pred_region
      _
    $region9: #{tpu_custom_call.1} parent=1 // pred_fallthru
      _
    // Predicated region
    $region10: #{tpu_custom_call.1} parent=1 // pred_check
      _
    $region11: #{tpu_custom_call.1} parent=1 // pred_check_branch
      %18 = sbr.rel (0) target = $region13
    $region12: #{tpu_custom_call.1} parent=1 // pred_region
      _
    $region13: #{tpu_custom_call.1} parent=1 // pred_fallthru
      _
    // Predicated region
    $region14: #{tpu_custom_call.1} parent=1 // pred_check
      _
    $region15: #{tpu_custom_call.1} parent=1 // pred_check_branch
      %20 = sbr.rel (0) target = $region17
    $region16: #{tpu_custom_call.1} parent=1 // pred_region
      _
    $region17: #{tpu_custom_call.1} parent=1 // pred_fallthru
      _
    // Predicated region
    $region18: #{tpu_custom_call.1} parent=1 // pred_check
      _
    $region19: #{tpu_custom_call.1} parent=1 // pred_check_branch
      %22 = sbr.rel (0) target = $region21
    $region20: #{tpu_custom_call.1} parent=1 // pred_region
      _
    $region21: #{tpu_custom_call.1} parent=1 // pred_fallthru
      _
    %v23 = vld [vmem:[%s0] sm:$0xff]
    %v24 = vld [vmem:[%s0 + $0x8] sm:$0xff]
    %v25 = vld [vmem:[%s0 + $0x10] sm:$0xff]
    %v26 = vld [vmem:[%s0 + $0x18] sm:$0xff]
    %v27 = vld [vmem:[%s0 + $0x20] sm:$0xff]
    %v28 = vld [vmem:[%s0 + $0x28] sm:$0xff]
    %v29 = vld [vmem:[%s0 + $0x30] sm:$0xff]
    %v30 = vld [vmem:[%s0 + $0x38] sm:$0xff]
    %v31 = vld [vmem:[%s0 + $0x40] sm:$0xff]
    %v32 = vld [vmem:[%s0 + $0x48] sm:$0xff]
    %v33 = vld [vmem:[%s0 + $0x50] sm:$0xff]
    %v34 = vld [vmem:[%s0 + $0x58] sm:$0xff]
    %v35 = vld [vmem:[%s0 + $0x60] sm:$0xff]
    %v36 = vld [vmem:[%s0 + $0x68] sm:$0xff]
    %v37 = vld [vmem:[%s0 + $0x70] sm:$0xff]
    %v38 = vld [vmem:[%s0 + $0x78] sm:$0xff]
    %v39 = vld [vmem:[%s0 + $0x80] sm:$0xff]
    %v40 = vld [vmem:[%s0 + $0x88] sm:$0xff]
    %v41 = vld [vmem:[%s0 + $0x90] sm:$0xff]
    %v42 = vld [vmem:[%s0 + $0x98] sm:$0xff]
    %v43 = vld [vmem:[%s0 + $0xa0] sm:$0xff]
    %v44 = vld [vmem:[%s0 + $0xa8] sm:$0xff]
    %v45 = vld [vmem:[%s0 + $0xb0] sm:$0xff]
    %v46 = vld [vmem:[%s0 + $0xb8] sm:$0xff]
    %v47 = vld [vmem:[%s0 + $0xc0] sm:$0xff]
    %v48 = vld [vmem:[%s0 + $0xc8] sm:$0xff]
    %v49 = vld [vmem:[%s0 + $0xd0] sm:$0xff]
    %v50 = vld [vmem:[%s0 + $0xd8] sm:$0xff]
    %v51 = vld [vmem:[%s0 + $0xe0] sm:$0xff]
    %v52 = vld [vmem:[%s0 + $0xe8] sm:$0xff]
    %v53 = vld [vmem:[%s0 + $0xf0] sm:$0xff]
    %v54 = vld [vmem:[%s0 + $0xf8] sm:$0xff]
    %v55 = vld [vmem:[%s0 + $0x100] sm:$0xff]
    %v56 = vld [vmem:[%s0 + $0x108] sm:$0xff]
    %v57 = vld [vmem:[%s0 + $0x110] sm:$0xff]
    %v58 = vld [vmem:[%s0 + $0x118] sm:$0xff]
    %v59 = vld [vmem:[%s0 + $0x120] sm:$0xff]
    %v60 = vld [vmem:[%s0 + $0x128] sm:$0xf]
    %v61 = vld [vmem:[%s1] sm:$0xff]
    %v62 = vld [vmem:[%s1 + $0x8] sm:$0x3]
    %v63 = vld [vmem:[%s2] sm:$0xff]
    %v64 = vld [vmem:[%s2 + $0x8] sm:$0x3]
    %66 = vset.pattern.permute.xlu0 0
    %67 = vperm.xlu0 %66, %v63
    %v68 = vpop.permute.xlu0 %67
    %71 = vset.pattern.permute.xlu0 0
    %72 = vperm.xlu0 %71, %v64
    %v73 = vpop.permute.xlu0 %72
    %vm75 = vcmask 146432
    %v77 = vsel %vm75, %v61, 0
    %v80 = vsel %vm75, %v62, 0
    %v83 = vsel %vm75, %v23, 0
    %v86 = vsel %vm75, %v24, 0
    %v89 = vsel %vm75, %v25, 0
    %v92 = vsel %vm75, %v26, 0
    %v95 = vsel %vm75, %v27, 0
    %v98 = vsel %vm75, %v28, 0
    %v101 = vsel %vm75, %v29, 0
    %v104 = vsel %vm75, %v30, 0
    %v107 = vsel %vm75, %v31, 0
    %v110 = vsel %vm75, %v32, 0
    %v113 = vsel %vm75, %v33, 0
    %v116 = vsel %vm75, %v34, 0
    %v119 = vsel %vm75, %v35, 0
    %v122 = vsel %vm75, %v36, 0
    %v125 = vsel %vm75, %v37, 0
    %v128 = vsel %vm75, %v38, 0
    %v131 = vsel %vm75, %v39, 0
    %v134 = vsel %vm75, %v40, 0
    %v137 = vsel %vm75, %v41, 0
    %v140 = vsel %vm75, %v42, 0
    %v143 = vsel %vm75, %v43, 0
    %v146 = vsel %vm75, %v44, 0
    %v149 = vsel %vm75, %v45, 0
    %v152 = vsel %vm75, %v46, 0
    %v155 = vsel %vm75, %v47, 0
    %v158 = vsel %vm75, %v48, 0
    %v161 = vsel %vm75, %v49, 0
    %v164 = vsel %vm75, %v50, 0
    %v167 = vsel %vm75, %v51, 0
    %v170 = vsel %vm75, %v52, 0
    %v173 = vsel %vm75, %v53, 0
    %v176 = vsel %vm75, %v54, 0
    %v179 = vsel %vm75, %v55, 0
    %v182 = vsel %vm75, %v56, 0
    %v185 = vsel %vm75, %v57, 0
    %v188 = vsel %vm75, %v58, 0
    %v191 = vsel %vm75, %v59, 0
    %v194 = vsel %vm75, %v60, 0
    %196 = vmatprep.subr.mxu0 0.0
    %197 = vmatpush1.xpose.msra.mxu0 %v83
    %198 = vmatprep.subr.mxu0 0.0
    %199 = vmatpush1.xpose.msra.mxu0 %v86
    %200 = vmatprep.subr.mxu0 0.0
    %201 = vmatpush1.xpose.msra.mxu0 %v89
    %202 = vmatprep.subr.mxu0 0.0
    %203 = vmatpush1.xpose.msra.mxu0 %v92
    %204 = vmatprep.subr.mxu0 0.0
    %205 = vmatpush1.xpose.msra.mxu0 %v95
    %206 = vmatprep.subr.mxu0 0.0
    %207 = vmatpush1.xpose.msra.mxu0 %v98
    %208 = vmatprep.subr.mxu0 0.0
    %209 = vmatpush1.xpose.msra.mxu0 %v101
    %210 = vmatprep.subr.mxu0 0.0
    %211 = vmatpush1.xpose.msra.mxu0 %v104
    %212 = vmatprep.subr.mxu0 0.0
    %213 = vmatpush1.xpose.msra.mxu0 %v107
    %214 = vmatprep.subr.mxu0 0.0
    %215 = vmatpush1.xpose.msra.mxu0 %v110
    %216 = vmatprep.subr.mxu0 0.0
    %217 = vmatpush1.xpose.msra.mxu0 %v113
    %218 = vmatprep.subr.mxu0 0.0
    %219 = vmatpush1.xpose.msra.mxu0 %v116
    %220 = vmatprep.subr.mxu0 0.0
    %221 = vmatpush1.xpose.msra.mxu0 %v119
    %222 = vmatprep.subr.mxu0 0.0
    %223 = vmatpush1.xpose.msra.mxu0 %v122
    %224 = vmatprep.subr.mxu0 0.0
    %225 = vmatpush1.xpose.msra.mxu0 %v125
    %226 = vmatprep.subr.mxu0 0.0
    %227 = vmatpush1.xpose.msra.mxu0 %v128
    %228 = vmatprep.subr.mxu0 0.0
    %229 = vmatpush1.xpose.msra.mxu0 %v131
    %230 = vmatprep.subr.mxu0 0.0
    %231 = vmatpush1.xpose.msra.mxu0 %v134
    %232 = vmatprep.subr.mxu0 0.0
    %233 = vmatpush1.xpose.msra.mxu0 %v137
    %234 = vmatprep.subr.mxu0 0.0
    %235 = vmatpush1.xpose.msra.mxu0 %v140
    %236 = vmatprep.subr.mxu0 0.0
    %237 = vmatpush1.xpose.msra.mxu0 %v143
    %238 = vmatprep.subr.mxu0 0.0
    %239 = vmatpush1.xpose.msra.mxu0 %v146
    %240 = vmatprep.subr.mxu0 0.0
    %241 = vmatpush1.xpose.msra.mxu0 %v149
    %242 = vmatprep.subr.mxu0 0.0
    %243 = vmatpush1.xpose.msra.mxu0 %v152
    %244 = vmatprep.subr.mxu0 0.0
    %245 = vmatpush1.xpose.msra.mxu0 %v155
    %246 = vmatprep.subr.mxu0 0.0
    %247 = vmatpush1.xpose.msra.mxu0 %v158
    %248 = vmatprep.subr.mxu0 0.0
    %249 = vmatpush1.xpose.msra.mxu0 %v161
    %250 = vmatprep.subr.mxu0 0.0
    %251 = vmatpush1.xpose.msra.mxu0 %v164
    %252 = vmatprep.subr.mxu0 0.0
    %253 = vmatpush1.xpose.msra.mxu0 %v167
    %254 = vmatprep.subr.mxu0 0.0
    %255 = vmatpush1.xpose.msra.mxu0 %v170
    %256 = vmatprep.subr.mxu0 0.0
    %257 = vmatpush1.xpose.msra.mxu0 %v173
    %258 = vmatprep.subr.mxu0 0.0
    %259 = vmatpush1.xpose.msra.mxu0 %v176
    %260 = vmatprep.mubr.f32.mxu0 0.0
    %261 = vmatmul.mubr.f32.gmra.mrb[0].mxu0 %v77
    %v262 = vpop.f32.mrb[0].mxu0
    %v263 = vadd.f32 %v68, %v262
    %v264 = vpop.f32.mrb[0].mxu0
    %v265 = vadd.f32 %v68, %v264
    %266 = vmatprep.mubr.f32.mxu0 0.0
    %267 = vmatmul.mubr.f32.gmra.mrb[0].mxu0 %v80
    %v268 = vpop.f32.mrb[0].mxu0
    %v269 = vadd.f32 %v73, %v268
    %v270 = vpop.f32.mrb[0].mxu0
    %v271 = vadd.f32 %v73, %v270
    %272 = vdwg.mxu0
    %273 = vmatprep.subr.mxu0 0.0
    %274 = vmatpush1.xpose.msra.mxu0 %v179
    %275 = vmatprep.subr.mxu0 0.0
    %276 = vmatpush1.xpose.msra.mxu0 %v182
    %277 = vmatprep.subr.mxu0 0.0
    %278 = vmatpush1.xpose.msra.mxu0 %v185
    %279 = vmatprep.subr.mxu0 0.0
    %280 = vmatpush1.xpose.msra.mxu0 %v188
    %281 = vmatprep.subr.mxu0 0.0
    %282 = vmatpush1.xpose.msra.mxu0 %v191
    %283 = vmatprep.subr.mxu0 0.0
    %284 = vmatpush1.xpose.msra.mxu0 %v194
    %285 = vmatprep.subr.mxu0 0.0
    %286 = vmatpush1.xpose.msra.mxu0 0.0
    %287 = vmatprep.subr.mxu0 0.0
    %288 = vmatpush1.xpose.msra.mxu0 0.0
    %289 = vmatprep.subr.mxu0 0.0
    %290 = vmatpush1.xpose.msra.mxu0 0.0
    %291 = vmatprep.subr.mxu0 0.0
    %292 = vmatpush1.xpose.msra.mxu0 0.0
    %293 = vmatprep.subr.mxu0 0.0
    %294 = vmatpush1.xpose.msra.mxu0 0.0
    %295 = vmatprep.subr.mxu0 0.0
    %296 = vmatpush1.xpose.msra.mxu0 0.0
    %297 = vmatprep.subr.mxu0 0.0
    %298 = vmatpush1.xpose.msra.mxu0 0.0
    %299 = vmatprep.subr.mxu0 0.0
    %300 = vmatpush1.xpose.msra.mxu0 0.0
    %301 = vmatprep.subr.mxu0 0.0
    %302 = vmatpush1.xpose.msra.mxu0 0.0
    %303 = vmatprep.subr.mxu0 0.0
    %304 = vmatpush1.xpose.msra.mxu0 0.0
    %305 = vmatprep.subr.mxu0 0.0
    %306 = vmatpush1.xpose.msra.mxu0 0.0
    %307 = vmatprep.subr.mxu0 0.0
    %308 = vmatpush1.xpose.msra.mxu0 0.0
    %309 = vmatprep.subr.mxu0 0.0
    %310 = vmatpush1.xpose.msra.mxu0 0.0
    %311 = vmatprep.subr.mxu0 0.0
    %312 = vmatpush1.xpose.msra.mxu0 0.0
    %313 = vmatprep.subr.mxu0 0.0
    %314 = vmatpush1.xpose.msra.mxu0 0.0
    %315 = vmatprep.subr.mxu0 0.0
    %316 = vmatpush1.xpose.msra.mxu0 0.0
    %317 = vmatprep.subr.mxu0 0.0
    %318 = vmatpush1.xpose.msra.mxu0 0.0
    %319 = vmatprep.subr.mxu0 0.0
    %320 = vmatpush1.xpose.msra.mxu0 0.0
    %321 = vmatprep.subr.mxu0 0.0
    %322 = vmatpush1.xpose.msra.mxu0 0.0
    %323 = vmatprep.subr.mxu0 0.0
    %324 = vmatpush1.xpose.msra.mxu0 0.0
    %325 = vmatprep.subr.mxu0 0.0
    %326 = vmatpush1.xpose.msra.mxu0 0.0
    %327 = vmatprep.subr.mxu0 0.0
    %328 = vmatpush1.xpose.msra.mxu0 0.0
    %329 = vmatprep.subr.mxu0 0.0
    %330 = vmatpush1.xpose.msra.mxu0 0.0
    %331 = vmatprep.subr.mxu0 0.0
    %332 = vmatpush1.xpose.msra.mxu0 0.0
    %333 = vmatprep.subr.mxu0 0.0
    %334 = vmatpush1.xpose.msra.mxu0 0.0
    %335 = vmatprep.subr.mxu0 0.0
    %336 = vmatpush1.xpose.msra.mxu0 0.0
    %337 = vmatprep.mubr.f32.mxu0 0.0
    %338 = vmatmul.mubr.f32.gmra.mrb[0].mxu0 %v77
    %v339 = vpop.f32.mrb[0].mxu0
    %v340 = vadd.f32 %v68, %v339
    %v341 = vpop.f32.mrb[0].mxu0
    %342 = vmatprep.mubr.f32.mxu0 0.0
    %343 = vmatmul.mubr.f32.gmra.mrb[0].mxu0 %v80
    %v344 = vpop.f32.mrb[0].mxu0
    %v345 = vadd.f32 %v73, %v344
    %v346 = vpop.f32.mrb[0].mxu0
    %347 = vdwg.mxu0
    %v348 = vmax.f32 %v263, 0.0
    %v349 = vmax.f32 %v265, 0.0
    %v350 = vmax.f32 %v340, 0.0
    %v351 = vmax.f32 %v269, 0.0
    %v352 = vmax.f32 %v271, 0.0
    %v353 = vmax.f32 %v345, 0.0
    %v354 = vld [vmem:[%s3] sm:$0xff]
    %v355 = vld [vmem:[%s3 + $0x8] sm:$0x3]
    %357 = vset.pattern.permute.xlu0 0
    %358 = vperm.xlu0 %357, %v354
    %v359 = vpop.permute.xlu0 %358
    %362 = vset.pattern.permute.xlu0 0
    %363 = vperm.xlu0 %362, %v355
    %v364 = vpop.permute.xlu0 %363
    %v366 = vmul.f32 %v348, %v359
    %v367 = vmul.f32 %v349, %v359
    %v368 = vmul.f32 %v350, %v359
    %v369 = vmul.f32 %v351, %v364
    %v370 = vmul.f32 %v352, %v364
    %v371 = vmul.f32 %v353, %v364
    %vm372 = vcmask 1041408
    %v373 = vsel %vm372, %v369, 0.0
    %v374 = vadd.f32 %v366, %v373
    %v375 = vrot.slane %v374, 4
    %v376 = vadd.f32 %v374, %v375
    %v377 = vrot.slane %v376, 2
    %v378 = vadd.f32 %v376, %v377
    %v379 = vrot.slane %v378, 1
    %v380 = vadd.f32 %v378, %v379
    %v381 = vsel %vm372, %v370, 0.0
    %v382 = vadd.f32 %v367, %v381
    %v383 = vrot.slane %v382, 4
    %v384 = vadd.f32 %v382, %v383
    %v385 = vrot.slane %v384, 2
    %v386 = vadd.f32 %v384, %v385
    %v387 = vrot.slane %v386, 1
    %v388 = vadd.f32 %v386, %v387
    %vm389 = vcmask 359424
    %v390 = vsel %vm389, %v368, 0.0
    %vm391 = vcmask 353280
    %v392 = vsel %vm391, %v371, 0.0
    %v393 = vadd.f32 %v390, %v392
    %v394 = vrot.slane %v393, 4
    %v395 = vadd.f32 %v393, %v394
    %v396 = vrot.slane %v395, 2
    %v397 = vadd.f32 %v395, %v396
    %v398 = vrot.slane %v397, 1
    %v399 = vadd.f32 %v397, %v398
    %v400 = vld [vmem:[#allocation2] sm:$0x1]
    %402 = vset.pattern.permute.xlu0 0
    %403 = vperm.xlu0 %402, %v400
    %v404 = vpop.permute.xlu0 %403
    %v406 = vlaneseq
    %v407 = vshrl.u32 %v406, 7
    %v408 = vsub.s32 0, %v407
    %v409 = vrot.slane %v404, %v408
    %v410 = vadd.f32 %v380, %v409
    %v411 = vadd.f32 %v388, %v409
    %v412 = vadd.f32 %v399, %v409
    %v413 = vxor.u32 %v410, 2147483648
    %v414 = vxor.u32 %v411, 2147483648
    %v415 = vxor.u32 %v412, 2147483648
    %v416 = vmul.f32 %v413, 1.442695
    %v417 = vpow.pop %v416
    %v418 = vmul.f32 %v414, 1.442695
    %v419 = vpow.pop %v418
    %v420 = vmul.f32 %v415, 1.442695
    %v421 = vpow.pop %v420
    %v422 = vadd.f32 %v417, 1.0
    %v423 = vadd.f32 %v419, 1.0
    %v424 = vadd.f32 %v421, 1.0
    %v425 = vrcp.pop %v422
    %v426 = vmul.f32 1.0, %v425
    %v427 = vrcp.pop %v423
    %v428 = vmul.f32 1.0, %v427
    %v429 = vrcp.pop %v424
    %v430 = vmul.f32 1.0, %v429
    %v434 = vcombine.low %v426, %v428
    %v436 = vunpack.c.l.s4 1966171168
    %v437 = vunpack.c.0.s8 %v436
    %v438 = vlaneseq
    %v439 = vshrl.u32 %v438, 7
    %v440 = vsub.s32 %v437, %v439
    %v441 = vrot.slane %v434, %v440
    %v443 = vunpack.c.l.s4 1966171168
    %v444 = vunpack.c.0.s8 %v443
    %v445 = vlaneseq
    %v446 = vshrl.u32 %v445, 7
    %v447 = vsub.s32 %v444, %v446
    %v448 = vrot.slane %v430, %v447
    %v449 = vcombine.low %v441, %v448
    %v451 = vunpack.c.l.s4 1966171168
    %v452 = vunpack.c.0.s8 %v451
    %v453 = vlaneseq
    %v454 = vshrl.u32 %v453, 7
    %v455 = vsub.s32 %v452, %v454
    %v456 = vrot.slane %v449, %v455
    %v458 = vlaneseq
    %vm459 = vcmp.ge.s32.totalorder %v458, 0
    %vm460 = vcmp.lt.s32.totalorder %v458, 300
    %vm461 = vmand %vm459, %vm460
    %462 = vst.msk [vmem:[#allocation3] sm:$0x7] %vm461, %v456
    // Predicated region
    $region22: #{tpu_custom_call.1} parent=1 // pred_check
      _
    $region23: #{tpu_custom_call.1} parent=1 // pred_check_branch
      %464 = sbr.rel (0) target = $region25
    $region24: #{tpu_custom_call.1} parent=1 // pred_region
      %s466 = ssub.s32 48, 48
      %467 = vsyncadd [#allocation4], %s466
      %s469 = sshll.u32 [#allocation3], 4
      %s470 = int_to_ptr.vmem [resolvable:$true] %s469
      %472 = dma.vmem_to_hbm [thread:$0]  %s470, 48, %s5, [#allocation4]
    $region25: #{tpu_custom_call.1} parent=1 // pred_fallthru
      _
    // Predicated region
    $region26: #{tpu_custom_call.1} parent=1 // pred_check
      _
    $region27: #{tpu_custom_call.1} parent=1 // pred_check_branch
      %474 = sbr.rel (0) target = $region29
    $region28: #{tpu_custom_call.1} parent=1 // pred_region
      %475 = dma.done [#allocation4], 48
    $region29: #{tpu_custom_call.1} parent=1 // pred_fallthru
      _
    %476 = vsyncpa [#allocation4], 1

</llo_original>
